<compile_context>
chip_gen: v6e
topology: v6e:2x2x1
jax: 0.10.0
libtpu: 0.0.40
codegen_flags: <defaults>
</compile_context>

<pallas_src>
import functools

import jax
import jax.numpy as jnp
from jax.experimental import pallas as pl
from jax.experimental.pallas import tpu as pltpu

_MIB = 1 << 20


def _round_up(x, m):
    return ((x + m - 1) // m) * m


def _vmem_capacity_bytes():
    try:
        return int(pltpu.get_tpu_info().vmem_capacity_bytes)
    except Exception:
        return 64 * _MIB  # conservative fallback (v7x per-TC VMEM)


def _clamp_vmem(nbytes, cap):
    hi = max(32 * _MIB, cap - 16 * _MIB)          # leave >=16 MiB headroom
    return int(min(max(int(nbytes), 32 * _MIB), hi))


# ----------------------------------------------------------------------------
# fused path: one full (C, HW) image per grid step, grid=(N,)
# ----------------------------------------------------------------------------
def _scse_fused_kernel(x_ref, w1t_ref, b1_ref, w2_ref, b2_ref, ws_ref, bs_ref,
                       o_ref, *, inv_hw):
    x = x_ref[0]                                                          # (C, HW) native dtype

    # cSE: global average pool (lane reduce, f32 accumulation) + tiny MLP on VPU/XLU.
    pooled = jnp.sum(x, axis=-1, keepdims=True, dtype=jnp.float32) * inv_hw       # (C, 1)
    h = jnp.sum(w1t_ref[...] * pooled, axis=0, keepdims=True) + b1_ref[...]       # (1, Cr)
    h = jnp.maximum(h, 0.0)                                                        # ReLU
    z = jnp.sum(w2_ref[...] * h, axis=-1, keepdims=True) + b2_ref[...]            # (C, 1)
    c_gate = jax.nn.sigmoid(z).astype(x.dtype)                                     # (C, 1)

    # sSE: weighted sublane reduce (no M=1 MXU matmul); ws cast to x.dtype so the
    # full-size product stays native width; accumulate in f32.
    ws = ws_ref[...].astype(x.dtype)                                               # (C, 1)
    s = jnp.sum(ws * x, axis=0, keepdims=True, dtype=jnp.float32) + bs_ref[0]      # (1, HW)
    s_gate = jax.nn.sigmoid(s).astype(x.dtype)                                     # (1, HW)

    # combine gates first -> one big multiply in native dtype
    o_ref[0] = (x * (c_gate + s_gate)).astype(o_ref.dtype)


# ----------------------------------------------------------------------------
# tiled path, pass 1: global mean + channel gate, grid=(N, cdiv(HW, T1))
# ----------------------------------------------------------------------------
def _pool_gate_kernel(x_ref, w1t_ref, b1_ref, w2_ref, b2_ref, g_ref, acc_ref,
                      *, inv_hw, hw, tile, needs_mask):
    t = pl.program_id(1)

    @pl.when(t == 0)
    def _():
        acc_ref[...] = jnp.zeros_like(acc_ref)

    x = x_ref[0]                                                          # (C, T)
    if needs_mask:
        # ragged last tile: zero lanes past HW before the pool sum (OOB block reads
        # are unspecified; never let them reach the accumulator)
        col = jax.lax.broadcasted_iota(jnp.int32, x.shape, 1) + t * tile
        x = jnp.where(col < hw, x, jnp.zeros_like(x))
    acc_ref[...] += jnp.sum(x, axis=-1, keepdims=True, dtype=jnp.float32)

    @pl.when(t == pl.num_programs(1) - 1)
    def _():
        pooled = acc_ref[...] * inv_hw                                             # (C, 1)
        h = jnp.sum(w1t_ref[...] * pooled, axis=0, keepdims=True) + b1_ref[...]    # (1, Cr)
        h = jnp.maximum(h, 0.0)
        z = jnp.sum(w2_ref[...] * h, axis=-1, keepdims=True) + b2_ref[...]         # (C, 1)
        g_ref[0] = jax.nn.sigmoid(z)


# ----------------------------------------------------------------------------
# tiled path, pass 2: spatial gate + combine per HW tile, grid=(N, cdiv(HW, T2))
# (no mask needed: garbage in OOB lanes only reaches output lanes that Pallas
#  drops on writeback)
# ----------------------------------------------------------------------------
def _combine_kernel(g_ref, x_ref, ws_ref, bs_ref, o_ref):
    x = x_ref[0]                                                          # (C, T) native dtype
    ws = ws_ref[...].astype(x.dtype)
    s = jnp.sum(ws * x, axis=0, keepdims=True, dtype=jnp.float32) + bs_ref[0]      # (1, T)
    s_gate = jax.nn.sigmoid(s).astype(x.dtype)
    c_gate = g_ref[0].astype(x.dtype)                                              # (C, 1)
    o_ref[0] = (x * (c_gate + s_gate)).astype(o_ref.dtype)


# ----------------------------------------------------------------------------
# public wrapper (NCHW in / NCHW out, like the PyTorch module)
# ----------------------------------------------------------------------------
def scse_module(x_nchw, w1, b1, w2, b2, ws, bs, *, tile_budget_bytes=2 * _MIB,
                force_tiled=False):
    """x_nchw: (N, C, H, W). w1:(Cr,C) b1:(Cr,) w2:(C,Cr) b2:(C,) ws:(C,) bs:(1,)."""
    N, C, H, W = x_nchw.shape
    HW = H * W
    Cr = w1.shape[0]
    dtype = x_nchw.dtype
    itemsize = jnp.dtype(dtype).itemsize

    # parameters in broadcast-friendly layouts (all f32, tiny)
    w1t = jnp.asarray(w1, jnp.float32).T.reshape(C, Cr)
    b1r = jnp.asarray(b1, jnp.float32).reshape(1, Cr)
    w2f = jnp.asarray(w2, jnp.float32).reshape(C, Cr)
    b2c = jnp.asarray(b2, jnp.float32).reshape(C, 1)
    wsc = jnp.asarray(ws, jnp.float32).reshape(C, 1)
    bsr = jnp.asarray(bs, jnp.float32).reshape(1,)

    x_flat = x_nchw.reshape(N, C, HW)             # no padding / extra HBM copies

    cap = _vmem_capacity_bytes()
    c8 = _round_up(C, 8)
    hw128 = _round_up(HW, 128)

    # fused working set: in+out double-buffered + native-dtype temps + f32 pool slack
    fused_need = c8 * hw128 * (6 * itemsize + 8) + 2 * _MIB
    fused_threshold = min(cap * 3 // 4, cap - 16 * _MIB)   # 128 MiB -> ~96, 64 MiB -> 48

    # byte-budgeted HW tiles (pass 1 is read-only -> larger tile)
    def _tile_lanes(budget):
        t = (int(budget) // max(C * itemsize, 1)) // 128 * 128
        return int(min(max(t, 128), hw128))

    T1 = _tile_lanes(2 * tile_budget_bytes)
    T2 = _tile_lanes(tile_budget_bytes)
    n_t1 = pl.cdiv(HW, T1)
    n_t2 = pl.cdiv(HW, T2)

    # <=64 MiB VMEM parts (v7x) have 2 TensorCores/chip: a large batch-1 fused grid=(1,)
    # leaves one core idle, so route it to the fully-parallel tiled pass instead.
    single_image_split = (N == 1 and cap <= 64 * _MIB and n_t2 >= 2
                          and fused_need > 16 * _MIB)

    use_tiled = force_tiled or fused_need > fused_threshold or single_image_split

    if not use_tiled:
        # ---------------- fused: one (1, C, HW) block per image ----------------
        out_flat = pl.pallas_call(
            functools.partial(_scse_fused_kernel, inv_hw=1.0 / HW),
            out_shape=jax.ShapeDtypeStruct((N, C, HW), dtype),
            grid_spec=pltpu.PrefetchScalarGridSpec(
                num_scalar_prefetch=0,
                grid=(N,),
                in_specs=[
                    pl.BlockSpec((1, C, HW), lambda n: (n, 0, 0)),       # x (full image)
                    pl.BlockSpec((C, Cr), lambda n: (0, 0)),             # w1^T
                    pl.BlockSpec((1, Cr), lambda n: (0, 0)),             # b1
                    pl.BlockSpec((C, Cr), lambda n: (0, 0)),             # w2
                    pl.BlockSpec((C, 1), lambda n: (0, 0)),              # b2
                    pl.BlockSpec((C, 1), lambda n: (0, 0)),              # ws
                    pl.BlockSpec(memory_space=pltpu.MemorySpace.SMEM),   # bs (scalar)
                ],
                out_specs=pl.BlockSpec((1, C, HW), lambda n: (n, 0, 0)),
            ),
            compiler_params=pltpu.CompilerParams(
                dimension_semantics=("parallel",),
                vmem_limit_bytes=_clamp_vmem(fused_need, cap)),
        )(x_flat, w1t, b1r, w2f, b2c, wsc, bsr)

    else:
        # ---------------- tiled two-pass: byte-budgeted HW tiles ----------------
        need1 = c8 * T1 * (3 * itemsize + 8) + 2 * _MIB
        need2 = c8 * T2 * (6 * itemsize + 8) + 2 * _MIB

        # pass 1: per-channel gate (N, C, 1)  — extra read of x, VMEM stays bounded
        c_gate = pl.pallas_call(
            functools.partial(_pool_gate_kernel, inv_hw=1.0 / HW, hw=HW,
                              tile=T1, needs_mask=(HW % T1) != 0),
            out_shape=jax.ShapeDtypeStruct((N, C, 1), jnp.float32),
            grid_spec=pltpu.PrefetchScalarGridSpec(
                num_scalar_prefetch=0,
                grid=(N, n_t1),
                in_specs=[
                    pl.BlockSpec((1, C, T1), lambda n, t: (n, 0, t)),    # x tile
                    pl.BlockSpec((C, Cr), lambda n, t: (0, 0)),          # w1^T
                    pl.BlockSpec((1, Cr), lambda n, t: (0, 0)),          # b1
                    pl.BlockSpec((C, Cr), lambda n, t: (0, 0)),          # w2
                    pl.BlockSpec((C, 1), lambda n, t: (0, 0)),           # b2
                ],
                out_specs=pl.BlockSpec((1, C, 1), lambda n, t: (n, 0, 0)),
                scratch_shapes=[pltpu.VMEM((C, 1), jnp.float32)],
            ),
            compiler_params=pltpu.CompilerParams(
                dimension_semantics=("parallel", "arbitrary"),
                vmem_limit_bytes=_clamp_vmem(need1, cap)),
        )(x_flat, w1t, b1r, w2f, b2c)

        # pass 2: spatial gate + combine per HW tile (fully parallel, lane-dense out)
        out_flat = pl.pallas_call(
            _combine_kernel,
            out_shape=jax.ShapeDtypeStruct((N, C, HW), dtype),
            grid_spec=pltpu.PrefetchScalarGridSpec(
                num_scalar_prefetch=0,
                grid=(N, n_t2),
                in_specs=[
                    pl.BlockSpec((1, C, 1), lambda n, t: (n, 0, 0)),     # c_gate (resident)
                    pl.BlockSpec((1, C, T2), lambda n, t: (n, 0, t)),    # x tile
                    pl.BlockSpec((C, 1), lambda n, t: (0, 0)),           # ws
                    pl.BlockSpec(memory_space=pltpu.MemorySpace.SMEM),   # bs (scalar)
                ],
                out_specs=pl.BlockSpec((1, C, T2), lambda n, t: (n, 0, t)),
            ),
            compiler_params=pltpu.CompilerParams(
                dimension_semantics=("parallel", "parallel"),
                vmem_limit_bytes=_clamp_vmem(need2, cap)),
        )(c_gate, x_flat, wsc, bsr)

    return out_flat.reshape(N, C, H, W)


# ----------------------------------------------------------------------------
# pure-JAX reference of the PyTorch forward (NCHW), full-precision contractions
# ----------------------------------------------------------------------------
def _reference(x, w1, b1, w2, b2, ws, bs):
    hp = jax.lax.Precision.HIGHEST
    pooled = jnp.mean(x, axis=(2, 3))                                             # (N, C)
    h = jax.nn.relu(jnp.einsum("nc,rc->nr", pooled, w1, precision=hp) + b1)       # (N, Cr)
    cgate = jax.nn.sigmoid(
        jnp.einsum("nr,cr->nc", h, w2, precision=hp) + b2)[:, :, None, None]      # (N,C,1,1)
    sgate = jax.nn.sigmoid(
        jnp.einsum("nchw,c->nhw", x, ws, precision=hp) + bs)[:, None, :, :]       # (N,1,H,W)
    return x * cgate + x * sgate


if __name__ == "__main__":
    # shapes consistent with SCSEModule(in_channels=32, reduction=16)
    N, C, H, W = 2, 32, 32, 32
    reduction = 16
    Cr = C // reduction

    key = jax.random.PRNGKey(0)
    ks = jax.random.split(key, 7)
    x = jax.random.normal(ks[0], (N, C, H, W), dtype=jnp.float32)

    # deterministic synthetic Conv2d-1x1 parameters (kernel dims squeezed)
    w1 = jax.random.normal(ks[1], (Cr, C), dtype=jnp.float32) * 0.2
    b1 = jax.random.normal(ks[2], (Cr,), dtype=jnp.float32) * 0.1
    w2 = jax.random.normal(ks[3], (C, Cr), dtype=jnp.float32) * 0.2
    b2 = jax.random.normal(ks[4], (C,), dtype=jnp.float32) * 0.1
    ws = jax.random.normal(ks[5], (C,), dtype=jnp.float32) * 0.2
    bs = jax.random.normal(ks[6], (1,), dtype=jnp.float32) * 0.1

    ref = _reference(x, w1, b1, w2, b2, ws, bs)
    out_fused = jax.block_until_ready(scse_module(x, w1, b1, w2, b2, ws, bs))
    out_tiled = jax.block_until_ready(
        scse_module(x, w1, b1, w2, b2, ws, bs, force_tiled=True))
    assert out_fused.shape == (N, C, H, W)
    assert jnp.allclose(out_fused, ref, atol=2e-5, rtol=2e-5), "fused path mismatch"
    assert jnp.allclose(out_tiled, ref, atol=2e-5, rtol=2e-5), "tiled path mismatch"

    # ragged spatial size (HW=323, not a multiple of 128): exercises the unpadded
    # fused full-dims block and the masked last tile of the 2-pass path.
    Hr, Wr = 17, 19
    xr = jax.random.normal(ks[0], (1, C, Hr, Wr), dtype=jnp.float32)
    refr = _reference(xr, w1, b1, w2, b2, ws, bs)
    outr_f = jax.block_until_ready(scse_module(xr, w1, b1, w2, b2, ws, bs))
    outr_t = jax.block_until_ready(
        scse_module(xr, w1, b1, w2, b2, ws, bs, force_tiled=True))
    assert jnp.allclose(outr_f, refr, atol=2e-5, rtol=2e-5), "ragged fused mismatch"
    assert jnp.allclose(outr_t, refr, atol=2e-5, rtol=2e-5), "ragged tiled mismatch"

    print("KERNEL_OK")
</pallas_src>

<mosaic_0001>
module attributes {stable_mosaic.version = 11 : i64} {
  func.func @_scse_fused_kernel(%arg0: i32, %arg1: memref<1x32x1024xf32, #tpu.memory_space<vmem>>, %arg2: memref<32x2xf32, #tpu.memory_space<vmem>>, %arg3: memref<1x2xf32, #tpu.memory_space<vmem>>, %arg4: memref<32x2xf32, #tpu.memory_space<vmem>>, %arg5: memref<32x1xf32, #tpu.memory_space<vmem>>, %arg6: memref<32x1xf32, #tpu.memory_space<vmem>>, %arg7: memref<1xf32, #tpu.memory_space<smem>>, %arg8: memref<1x32x1024xf32, #tpu.memory_space<vmem>>) attributes {dimension_semantics = [#tpu.dimension_semantics<parallel>], iteration_bounds = array<i64: 2>, scalar_prefetch = 0 : i64, scratch_operands = 0 : i64, tpu.core_type = #tpu.core_type<tc>, window_params = [{transform_indices = @transform_0, window_bounds = array<i64: 1, 32, 1024>}, {pipeline_mode = #tpu.pipeline_mode<synchronous>, transform_indices = @transform_1, window_bounds = array<i64: 32, 2>}, {pipeline_mode = #tpu.pipeline_mode<synchronous>, transform_indices = @transform_2, window_bounds = array<i64: 1, 2>}, {pipeline_mode = #tpu.pipeline_mode<synchronous>, transform_indices = @transform_3, window_bounds = array<i64: 32, 2>}, {pipeline_mode = #tpu.pipeline_mode<synchronous>, transform_indices = @transform_4, window_bounds = array<i64: 32, 1>}, {pipeline_mode = #tpu.pipeline_mode<synchronous>, transform_indices = @transform_5, window_bounds = array<i64: 32, 1>}, {transform_indices = @transform_6, window_bounds = array<i64: 1>}, {transform_indices = @transform_7, window_bounds = array<i64: 1, 32, 1024>}]} {
    %c0 = arith.constant 0 : index
    %c0_0 = arith.constant 0 : index
    %c0_1 = arith.constant 0 : index
    %0 = vector.load %arg1[%c0, %c0_0, %c0_1] : memref<1x32x1024xf32, #tpu.memory_space<vmem>>, vector<1x32x1024xf32>
    %1 = vector.shape_cast %0 : vector<1x32x1024xf32> to vector<32x1024xf32>
    %cst = arith.constant dense<0.000000e+00> : vector<32xf32>
    %2 = vector.multi_reduction <add>, %1, %cst [1] : vector<32x1024xf32> to vector<32xf32>
    %3 = vector.shape_cast %2 : vector<32xf32> to vector<32x1xf32>
    %cst_2 = arith.constant 9.765625E-4 : f32
    %4 = vector.broadcast %cst_2 : f32 to vector<32x1xf32>
    %5 = arith.mulf %3, %4 : vector<32x1xf32>
    %c0_3 = arith.constant 0 : index
    %c0_4 = arith.constant 0 : index
    %6 = vector.load %arg2[%c0_3, %c0_4] : memref<32x2xf32, #tpu.memory_space<vmem>>, vector<32x2xf32>
    %7 = vector.broadcast %5 : vector<32x1xf32> to vector<32x2xf32>
    %8 = arith.mulf %6, %7 : vector<32x2xf32>
    %cst_5 = arith.constant dense<0.000000e+00> : vector<2xf32>
    %9 = vector.multi_reduction <add>, %8, %cst_5 [0] : vector<32x2xf32> to vector<2xf32>
    %10 = vector.shape_cast %9 : vector<2xf32> to vector<1x2xf32>
    %c0_6 = arith.constant 0 : index
    %c0_7 = arith.constant 0 : index
    %11 = vector.load %arg3[%c0_6, %c0_7] : memref<1x2xf32, #tpu.memory_space<vmem>>, vector<1x2xf32>
    %12 = arith.addf %10, %11 : vector<1x2xf32>
    %cst_8 = arith.constant 0.000000e+00 : f32
    %13 = vector.broadcast %cst_8 : f32 to vector<1x2xf32>
    %14 = arith.maximumf %12, %13 : vector<1x2xf32>
    %c0_9 = arith.constant 0 : index
    %c0_10 = arith.constant 0 : index
    %15 = vector.load %arg4[%c0_9, %c0_10] : memref<32x2xf32, #tpu.memory_space<vmem>>, vector<32x2xf32>
    %16 = vector.broadcast %14 : vector<1x2xf32> to vector<32x2xf32>
    %17 = arith.mulf %15, %16 : vector<32x2xf32>
    %cst_11 = arith.constant dense<0.000000e+00> : vector<32xf32>
    %18 = vector.multi_reduction <add>, %17, %cst_11 [1] : vector<32x2xf32> to vector<32xf32>
    %19 = vector.shape_cast %18 : vector<32xf32> to vector<32x1xf32>
    %c0_12 = arith.constant 0 : index
    %c0_13 = arith.constant 0 : index
    %20 = vector.load %arg5[%c0_12, %c0_13] : memref<32x1xf32, #tpu.memory_space<vmem>>, vector<32x1xf32>
    %21 = arith.addf %19, %20 : vector<32x1xf32>
    %22 = arith.negf %21 : vector<32x1xf32>
    %23 = math.exp %22 : vector<32x1xf32>
    %cst_14 = arith.constant 1.000000e+00 : f32
    %24 = vector.broadcast %cst_14 : f32 to vector<32x1xf32>
    %25 = arith.addf %24, %23 : vector<32x1xf32>
    %26 = arith.divf %24, %25 : vector<32x1xf32>
    %c0_15 = arith.constant 0 : index
    %c0_16 = arith.constant 0 : index
    %27 = vector.load %arg6[%c0_15, %c0_16] : memref<32x1xf32, #tpu.memory_space<vmem>>, vector<32x1xf32>
    %28 = vector.broadcast %27 : vector<32x1xf32> to vector<32x1024xf32>
    %29 = arith.mulf %28, %1 : vector<32x1024xf32>
    %cst_17 = arith.constant dense<0.000000e+00> : vector<1024xf32>
    %30 = vector.multi_reduction <add>, %29, %cst_17 [0] : vector<32x1024xf32> to vector<1024xf32>
    %31 = vector.shape_cast %30 : vector<1024xf32> to vector<1x1024xf32>
    %c0_18 = arith.constant 0 : index
    %32 = memref.load %arg7[%c0_18] : memref<1xf32, #tpu.memory_space<smem>>
    %33 = vector.broadcast %32 : f32 to vector<1x1024xf32>
    %34 = arith.addf %31, %33 : vector<1x1024xf32>
    %35 = arith.negf %34 : vector<1x1024xf32>
    %36 = math.exp %35 : vector<1x1024xf32>
    %cst_19 = arith.constant 1.000000e+00 : f32
    %37 = vector.broadcast %cst_19 : f32 to vector<1x1024xf32>
    %38 = arith.addf %37, %36 : vector<1x1024xf32>
    %39 = arith.divf %37, %38 : vector<1x1024xf32>
    %40 = vector.broadcast %26 : vector<32x1xf32> to vector<32x1024xf32>
    %41 = vector.broadcast %39 : vector<1x1024xf32> to vector<32x1024xf32>
    %42 = arith.addf %40, %41 : vector<32x1024xf32>
    %43 = arith.mulf %1, %42 : vector<32x1024xf32>
    %c0_20 = arith.constant 0 : index
    %c0_21 = arith.constant 0 : index
    %c0_22 = arith.constant 0 : index
    %44 = vector.load %arg8[%c0_20, %c0_21, %c0_22] : memref<1x32x1024xf32, #tpu.memory_space<vmem>>, vector<1x32x1024xf32>
    %45 = vector.shape_cast %44 : vector<1x32x1024xf32> to vector<32x1024xf32>
    %46 = vector.shape_cast %43 : vector<32x1024xf32> to vector<1x32x1024xf32>
    tpu.vector_store %arg8[%c0_20, %c0_21, %c0_22], %46 {strides = array<i32>} : memref<1x32x1024xf32, #tpu.memory_space<vmem>>, vector<1x32x1024xf32>,
    return
  }
  func.func @transform_0(%arg0: i32) -> (i32, i32, i32) {
    %c0_i32 = arith.constant 0 : i32
    %c0_i32_0 = arith.constant 0 : i32
    %c0_i32_1 = arith.constant 0 : i32
    return %arg0, %c0_i32, %c0_i32_0 : i32, i32, i32
  }
  func.func @transform_1(%arg0: i32) -> (i32, i32) {
    %c0_i32 = arith.constant 0 : i32
    %c0_i32_0 = arith.constant 0 : i32
    %c0_i32_1 = arith.constant 0 : i32
    return %c0_i32, %c0_i32_0 : i32, i32
  }
  func.func @transform_2(%arg0: i32) -> (i32, i32) {
    %c0_i32 = arith.constant 0 : i32
    %c0_i32_0 = arith.constant 0 : i32
    %c0_i32_1 = arith.constant 0 : i32
    return %c0_i32, %c0_i32_0 : i32, i32
  }
  func.func @transform_3(%arg0: i32) -> (i32, i32) {
    %c0_i32 = arith.constant 0 : i32
    %c0_i32_0 = arith.constant 0 : i32
    %c0_i32_1 = arith.constant 0 : i32
    return %c0_i32, %c0_i32_0 : i32, i32
  }
  func.func @transform_4(%arg0: i32) -> (i32, i32) {
    %c0_i32 = arith.constant 0 : i32
    %c0_i32_0 = arith.constant 0 : i32
    %c0_i32_1 = arith.constant 0 : i32
    return %c0_i32, %c0_i32_0 : i32, i32
  }
  func.func @transform_5(%arg0: i32) -> (i32, i32) {
    %c0_i32 = arith.constant 0 : i32
    %c0_i32_0 = arith.constant 0 : i32
    %c0_i32_1 = arith.constant 0 : i32
    return %c0_i32, %c0_i32_0 : i32, i32
  }
  func.func @transform_6(%arg0: i32) -> i32 {
    %c0_i32 = arith.constant 0 : i32
    %c0_i32_0 = arith.constant 0 : i32
    return %c0_i32 : i32
  }
  func.func @transform_7(%arg0: i32) -> (i32, i32, i32) {
    %c0_i32 = arith.constant 0 : i32
    %c0_i32_0 = arith.constant 0 : i32
    %c0_i32_1 = arith.constant 0 : i32
    return %arg0, %c0_i32, %c0_i32_0 : i32, i32, i32
  }
}

</mosaic_0001>

<llo_original>
// kernel: tpu_custom_call.1
$region0: #{tpu_custom_call.1}
  #allocation0 [shape = 'u32[]', space=smem, size = 0x4, offset = 0x4, fixed_abs, tag = 'smem constant byte address 0x4 - core index']
  #allocation1 [shape = 'u32[144,128]{1,0:T(1,128)}', space=vmem, size = 0x12000, scoped, tag = 'internal scratch']
  #allocation2 [shape = 'f32[1]{0:T(128)S(6)}', space=smem, size = 0x200, scoped, tag = 'scoped memory for tpu_custom_call.1']
  %s0 = inlined_call_operand.hbm [shape: f32[2,32,1024], index: 0, kind: input, shape index: {}]
  %s1 = inlined_call_operand.vmem [shape: f32[32,2], index: 1, kind: input, shape index: {}]
  %s2 = inlined_call_operand.vmem [shape: f32[1,2], index: 2, kind: input, shape index: {}]
  %s3 = inlined_call_operand.vmem [shape: f32[32,2], index: 3, kind: input, shape index: {}]
  %s4 = inlined_call_operand.vmem [shape: f32[32,1], index: 4, kind: input, shape index: {}]
  %s5 = inlined_call_operand.vmem [shape: f32[32,1], index: 5, kind: input, shape index: {}]
  %s6 = inlined_call_operand.<no memory space> [shape: f32[1], index: 6, kind: input, shape index: {}]
  %s7 = inlined_call_operand.hbm [shape: f32[2,32,1024], index: 7, kind: output, shape index: {}]
  %s8 = sld [smem:[#allocation0]]
  $region65: #{tpu_custom_call.1} parent=0
    _
  %s10 = ssub.s32 1, %s8
  %s11 = scalar_select 0, %s10, %s8
  %12 = sst [smem:[#allocation2]] %s6
  $region1: #{tpu_custom_call.1} parent=0
    #allocation3 [shape = 'u8[262144]{0}', space=vmem, size = 0x40000, scoped, tag = 'input window, operand 0']
    #allocation4 [shape = 's32[2]{0}', space=sflag, size = 0x8, scoped, tag = 'scoped memory for tpu_custom_call.1']
    #allocation5 [shape = 's32[2]{0}', space=sflag, size = 0x8, scoped, tag = 'scoped memory for tpu_custom_call.1']
    #allocation6 [shape = 'u8[262144]{0}', space=vmem, size = 0x40000, scoped, tag = 'output window, operand 0']
    %13 = vsyncpa [#allocation4], 0
    %s14 = scalar_lea.sflag [#allocation4], 1
    %15 = vsyncpa %s14, 0
    %16 = vsyncpa [#allocation5], 0
    %s17 = scalar_lea.sflag [#allocation5], 1
    %18 = vsyncpa %s17, 0
    loop: start=0, step=1, limit=4
    $region2: #{tpu_custom_call.1} parent=1 // loop_pre_header
      _
    $region3: #{tpu_custom_call.1} parent=1 // loop_header
      %s20 = sphi 0, %s24
      %p21 = scmp.ge.s32.totalorder %s20, 4
      %s30 = sphi 0, %s32
      %s33 = sphi 0, %s30
      %s34 = sphi 0, %s33
      %s50 = sphi 0, %s34
      %s54 = sphi 0, %s54
      %s56 = sphi 0, %s54
      %s57 = sphi 0, %s56
      %s71 = sphi 0, %s57
      %s75 = sphi 0, %s75
      %s77 = sphi 0, %s75
      %s78 = sphi 0, %s77
      %s92 = sphi 0, %s78
      %s96 = sphi 0, %s96
      %s98 = sphi 0, %s96
      %s99 = sphi 0, %s98
      %s113 = sphi 0, %s99
      %s117 = sphi 0, %s117
      %s119 = sphi 0, %s117
      %s120 = sphi 0, %s119
      %s134 = sphi 0, %s120
      %s138 = sphi 0, %s138
      %s140 = sphi 0, %s138
      %s141 = sphi 0, %s140
      %s155 = sphi 0, %s141
      %s159 = sphi 0, %s159
      %s161 = sphi 0, %s159
      %s162 = sphi 0, %s161
      %s176 = sphi 0, %s162
      %s182 = sphi 0, %s184
      %s185 = sphi 0, %s182
      %s186 = sphi 0, %s185
      %s202 = sphi 0, %s186
    $region4: #{tpu_custom_call.1} parent=1 // loop_header_branch
      %23 = sbr.rel (%p21) target = $region8
    $region5: #{tpu_custom_call.1} parent=1 // loop_body
      %s25 = ssub.s32 %s20, 1
      %s26 = ssub.s32 %s20, 2
      %s27 = sadd.s32 %s20, 1
      %s28 = ssub.s32 %s20, %s27
      %p29 = scmp.eq.s32.totalorder %s28, 0
      %s31 = sadd.s32 %s30, 1
      %s32 = scalar_select %p29, %s30, %s31
      %p35 = pneg %p29
      %p36 = scmp.eq.s32.totalorder %s20, 1
      %p37 = por %p35, %p36
      %p38 = scmp.ne.s32.totalorder %s30, %s33
      %p39 = scmp.eq.s32.totalorder %s20, 0
      %p40 = por %p38, %p39
      %p41 = scmp.ne.s32.totalorder %s30, %s33
      %p42 = scmp.eq.s32.totalorder %s25, 1
      %p43 = por %p41, %p42
      %p44 = scmp.ne.s32.totalorder %s33, %s34
      %p45 = scmp.eq.s32.totalorder %s25, 0
      %p46 = por %p44, %p45
      %p47 = scmp.ne.s32.totalorder %s33, %s34
      %p48 = scmp.eq.s32.totalorder %s26, 1
      %p49 = por %p47, %p48
      %p51 = scmp.ne.s32.totalorder %s34, %s50
      %p52 = scmp.eq.s32.totalorder %s26, 0
      %p53 = por %p51, %p52
      %s55 = sadd.s32 %s54, 1
      %p58 = scmp.eq.s32.totalorder %s20, 1
      %p59 = scmp.ne.s32.totalorder %s54, %s56
      %p60 = scmp.eq.s32.totalorder %s20, 0
      %p61 = por %p59, %p60
      %p62 = scmp.ne.s32.totalorder %s54, %s56
      %p63 = scmp.eq.s32.totalorder %s25, 1
      %p64 = por %p62, %p63
      %p65 = scmp.ne.s32.totalorder %s56, %s57
      %p66 = scmp.eq.s32.totalorder %s25, 0
      %p67 = por %p65, %p66
      %p68 = scmp.ne.s32.totalorder %s56, %s57
      %p69 = scmp.eq.s32.totalorder %s26, 1
      %p70 = por %p68, %p69
      %p72 = scmp.ne.s32.totalorder %s57, %s71
      %p73 = scmp.eq.s32.totalorder %s26, 0
      %p74 = por %p72, %p73
      %s76 = sadd.s32 %s75, 1
      %p79 = scmp.eq.s32.totalorder %s20, 1
      %p80 = scmp.ne.s32.totalorder %s75, %s77
      %p81 = scmp.eq.s32.totalorder %s20, 0
      %p82 = por %p80, %p81
      %p83 = scmp.ne.s32.totalorder %s75, %s77
      %p84 = scmp.eq.s32.totalorder %s25, 1
      %p85 = por %p83, %p84
      %p86 = scmp.ne.s32.totalorder %s77, %s78
      %p87 = scmp.eq.s32.totalorder %s25, 0
      %p88 = por %p86, %p87
      %p89 = scmp.ne.s32.totalorder %s77, %s78
      %p90 = scmp.eq.s32.totalorder %s26, 1
      %p91 = por %p89, %p90
      %p93 = scmp.ne.s32.totalorder %s78, %s92
      %p94 = scmp.eq.s32.totalorder %s26, 0
      %p95 = por %p93, %p94
      %s97 = sadd.s32 %s96, 1
      %p100 = scmp.eq.s32.totalorder %s20, 1
      %p101 = scmp.ne.s32.totalorder %s96, %s98
      %p102 = scmp.eq.s32.totalorder %s20, 0
      %p103 = por %p101, %p102
      %p104 = scmp.ne.s32.totalorder %s96, %s98
      %p105 = scmp.eq.s32.totalorder %s25, 1
      %p106 = por %p104, %p105
      %p107 = scmp.ne.s32.totalorder %s98, %s99
      %p108 = scmp.eq.s32.totalorder %s25, 0
      %p109 = por %p107, %p108
      %p110 = scmp.ne.s32.totalorder %s98, %s99
      %p111 = scmp.eq.s32.totalorder %s26, 1
      %p112 = por %p110, %p111
      %p114 = scmp.ne.s32.totalorder %s99, %s113
      %p115 = scmp.eq.s32.totalorder %s26, 0
      %p116 = por %p114, %p115
      %s118 = sadd.s32 %s117, 1
      %p121 = scmp.eq.s32.totalorder %s20, 1
      %p122 = scmp.ne.s32.totalorder %s117, %s119
      %p123 = scmp.eq.s32.totalorder %s20, 0
      %p124 = por %p122, %p123
      %p125 = scmp.ne.s32.totalorder %s117, %s119
      %p126 = scmp.eq.s32.totalorder %s25, 1
      %p127 = por %p125, %p126
      %p128 = scmp.ne.s32.totalorder %s119, %s120
      %p129 = scmp.eq.s32.totalorder %s25, 0
      %p130 = por %p128, %p129
      %p131 = scmp.ne.s32.totalorder %s119, %s120
      %p132 = scmp.eq.s32.totalorder %s26, 1
      %p133 = por %p131, %p132
      %p135 = scmp.ne.s32.totalorder %s120, %s134
      %p136 = scmp.eq.s32.totalorder %s26, 0
      %p137 = por %p135, %p136
      %s139 = sadd.s32 %s138, 1
      %p142 = scmp.eq.s32.totalorder %s20, 1
      %p143 = scmp.ne.s32.totalorder %s138, %s140
      %p144 = scmp.eq.s32.totalorder %s20, 0
      %p145 = por %p143, %p144
      %p146 = scmp.ne.s32.totalorder %s138, %s140
      %p147 = scmp.eq.s32.totalorder %s25, 1
      %p148 = por %p146, %p147
      %p149 = scmp.ne.s32.totalorder %s140, %s141
      %p150 = scmp.eq.s32.totalorder %s25, 0
      %p151 = por %p149, %p150
      %p152 = scmp.ne.s32.totalorder %s140, %s141
      %p153 = scmp.eq.s32.totalorder %s26, 1
      %p154 = por %p152, %p153
      %p156 = scmp.ne.s32.totalorder %s141, %s155
      %p157 = scmp.eq.s32.totalorder %s26, 0
      %p158 = por %p156, %p157
      %s160 = sadd.s32 %s159, 1
      %p163 = scmp.eq.s32.totalorder %s20, 1
      %p164 = scmp.ne.s32.totalorder %s159, %s161
      %p165 = scmp.eq.s32.totalorder %s20, 0
      %p166 = por %p164, %p165
      %p167 = scmp.ne.s32.totalorder %s159, %s161
      %p168 = scmp.eq.s32.totalorder %s25, 1
      %p169 = por %p167, %p168
      %p170 = scmp.ne.s32.totalorder %s161, %s162
      %p171 = scmp.eq.s32.totalorder %s25, 0
      %p172 = por %p170, %p171
      %p173 = scmp.ne.s32.totalorder %s161, %s162
      %p174 = scmp.eq.s32.totalorder %s26, 1
      %p175 = por %p173, %p174
      %p177 = scmp.ne.s32.totalorder %s162, %s176
      %p178 = scmp.eq.s32.totalorder %s26, 0
      %p179 = por %p177, %p178
      %s180 = ssub.s32 %s20, %s27
      %p181 = scmp.eq.s32.totalorder %s180, 0
      %s183 = sadd.s32 %s182, 1
      %s184 = scalar_select %p181, %s182, %s183
      %p187 = pneg %p181
      %p188 = scmp.eq.s32.totalorder %s20, 1
      %p189 = por %p187, %p188
      %p190 = scmp.ne.s32.totalorder %s182, %s185
      %p191 = scmp.eq.s32.totalorder %s20, 0
      %p192 = por %p190, %p191
      %p193 = scmp.ne.s32.totalorder %s182, %s185
      %p194 = scmp.eq.s32.totalorder %s25, 1
      %p195 = por %p193, %p194
      %p196 = scmp.ne.s32.totalorder %s185, %s186
      %p197 = scmp.eq.s32.totalorder %s25, 0
      %p198 = por %p196, %p197
      %p199 = scmp.ne.s32.totalorder %s185, %s186
      %p200 = scmp.eq.s32.totalorder %s26, 1
      %p201 = por %p199, %p200
      %p203 = scmp.ne.s32.totalorder %s186, %s202
      %p204 = scmp.eq.s32.totalorder %s26, 0
      %p205 = por %p203, %p204
      %p206 = scmp.le.s32.totalorder 1, %s20
      %p207 = scmp.lt.s32.totalorder %s20, 3
      %p208 = pnand %p206, %p207
      %p209 = pneg %p208
      // Predicated region
      $region9: #{tpu_custom_call.1} parent=5 // pred_check
        _
      $region10: #{tpu_custom_call.1} parent=5 // pred_check_branch
        %211 = sbr.rel (%p208) target = $region12
      $region11: #{tpu_custom_call.1} parent=5 // pred_region
        %s212 = ssub.s32 %s20, 1
        // Predicated region
        $region13: #{tpu_custom_call.1} parent=11 // pred_check
          %p213 = pneg %p67
        $region14: #{tpu_custom_call.1} parent=11 // pred_check_branch
          %215 = sbr.rel (%p213) target = $region16
        $region15: #{tpu_custom_call.1} parent=11 // pred_region
          _
        $region16: #{tpu_custom_call.1} parent=11 // pred_fallthru
          _
        // Predicated region
        $region17: #{tpu_custom_call.1} parent=11 // pred_check
          %p216 = pneg %p88
        $region18: #{tpu_custom_call.1} parent=11 // pred_check_branch
          %218 = sbr.rel (%p216) target = $region20
        $region19: #{tpu_custom_call.1} parent=11 // pred_region
          _
        $region20: #{tpu_custom_call.1} parent=11 // pred_fallthru
          _
        // Predicated region
        $region21: #{tpu_custom_call.1} parent=11 // pred_check
          %p219 = pneg %p109
        $region22: #{tpu_custom_call.1} parent=11 // pred_check_branch
          %221 = sbr.rel (%p219) target = $region24
        $region23: #{tpu_custom_call.1} parent=11 // pred_region
          _
        $region24: #{tpu_custom_call.1} parent=11 // pred_fallthru
          _
        // Predicated region
        $region25: #{tpu_custom_call.1} parent=11 // pred_check
          %p222 = pneg %p130
        $region26: #{tpu_custom_call.1} parent=11 // pred_check_branch
          %224 = sbr.rel (%p222) target = $region28
        $region27: #{tpu_custom_call.1} parent=11 // pred_region
          _
        $region28: #{tpu_custom_call.1} parent=11 // pred_fallthru
          _
        // Predicated region
        $region29: #{tpu_custom_call.1} parent=11 // pred_check
          %p225 = pneg %p151
        $region30: #{tpu_custom_call.1} parent=11 // pred_check_branch
          %227 = sbr.rel (%p225) target = $region32
        $region31: #{tpu_custom_call.1} parent=11 // pred_region
          _
        $region32: #{tpu_custom_call.1} parent=11 // pred_fallthru
          _
        // Predicated region
        $region33: #{tpu_custom_call.1} parent=11 // pred_check
          %p228 = pneg %p172
        $region34: #{tpu_custom_call.1} parent=11 // pred_check_branch
          %230 = sbr.rel (%p228) target = $region36
        $region35: #{tpu_custom_call.1} parent=11 // pred_region
          _
        $region36: #{tpu_custom_call.1} parent=11 // pred_fallthru
          _
      $region12: #{tpu_custom_call.1} parent=5 // pred_fallthru
        _
      %p231 = scmp.lt.s32.totalorder %s20, 2
      // Predicated region
      $region37: #{tpu_custom_call.1} parent=5 // pred_check
        %p232 = pneg %p231
      $region38: #{tpu_custom_call.1} parent=5 // pred_check_branch
        %234 = sbr.rel (%p232) target = $region40
      $region39: #{tpu_custom_call.1} parent=5 // pred_region
        // Predicated region
        $region41: #{tpu_custom_call.1} parent=39 // pred_check
          %p235 = pneg %p40
        $region42: #{tpu_custom_call.1} parent=39 // pred_check_branch
          %237 = sbr.rel (%p235) target = $region44
        $region43: #{tpu_custom_call.1} parent=39 // pred_region
          %s238 = sand.u32 %s30, 1
          %s239 = scalar_lea.sflag [#allocation4], %s238
          %s240 = sand.u32 %s30, 1
          %s241 = smul.addr %s240, 256
          %s242 = scalar_lea.vmem [#allocation3], %s241
          %s244 = ssub.s32 4096, 4096
          %245 = vsyncadd %s239, %s244
          %s246 = smul.addr %s20, 32
          %s247 = smul.addr %s246, 128
          %s248 = scalar_lea.hbm %s0, %s247
          %s249 = sshll.u32 %s242, 4
          %s250 = int_to_ptr.vmem [resolvable:$true] %s249
          %255 = dma.hbm_to_vmem [thread:$0]  %s248, 4096, %s250, %s239, 1024, 1024, 64
        $region44: #{tpu_custom_call.1} parent=39 // pred_fallthru
          _
      $region40: #{tpu_custom_call.1} parent=5 // pred_fallthru
        _
      %p256 = scmp.le.s32.totalorder 1, %s20
      %p257 = scmp.lt.s32.totalorder %s20, 3
      %p258 = pnand %p256, %p257
      %p259 = pneg %p258
      // Predicated region
      $region45: #{tpu_custom_call.1} parent=5 // pred_check
        _
      $region46: #{tpu_custom_call.1} parent=5 // pred_check_branch
        %261 = sbr.rel (%p258) target = $region48
      $region47: #{tpu_custom_call.1} parent=5 // pred_region
        %s262 = ssub.s32 %s20, 1
        %s263 = sand.u32 %s33, 1
        %s264 = scalar_lea.sflag [#allocation4], %s263
        %s265 = sand.u32 %s33, 1
        %s266 = smul.addr %s265, 256
        %s267 = scalar_lea.vmem [#allocation3], %s266
        // Predicated region
        $region49: #{tpu_custom_call.1} parent=47 // pred_check
          %p268 = pneg %p46
        $region50: #{tpu_custom_call.1} parent=47 // pred_check_branch
          %270 = sbr.rel (%p268) target = $region52
        $region51: #{tpu_custom_call.1} parent=47 // pred_region
          %271 = dma.done %s264, 4096
        $region52: #{tpu_custom_call.1} parent=47 // pred_fallthru
          _
        %s272 = sand.u32 %s33, 1
        %s273 = scalar_lea.sflag [#allocation4], %s272
        %s274 = sand.u32 %s33, 1
        %s275 = smul.addr %s274, 256
        %s276 = scalar_lea.vmem [#allocation3], %s275
        %p277 = pneg %p46
        %p278 = pneg %p43
        %p279 = pneg %p67
        %p280 = pneg %p64
        %p281 = pneg %p88
        %p282 = pneg %p85
        %p283 = pneg %p109
        %p284 = pneg %p106
        %p285 = pneg %p130
        %p286 = pneg %p127
        %p287 = pneg %p151
        %p288 = pneg %p148
        %p289 = pneg %p172
        %p290 = pneg %p169
        %p291 = pneg %p198
        %p292 = pneg %p195
        %s293 = sand.u32 %s185, 1
        %s294 = scalar_lea.sflag [#allocation5], %s293
        %s295 = sand.u32 %s185, 1
        %s296 = smul.addr %s295, 256
        %s297 = scalar_lea.vmem [#allocation6], %s296
        %v298 = vld [vmem:[%s267] sm:$0xff]
        %v299 = vld [vmem:[%s267 + $0x8] sm:$0xff]
        %v300 = vld [vmem:[%s267 + $0x10] sm:$0xff]
        %v301 = vld [vmem:[%s267 + $0x18] sm:$0xff]
        %v302 = vld [vmem:[%s267 + $0x20] sm:$0xff]
        %v303 = vld [vmem:[%s267 + $0x28] sm:$0xff]
        %v304 = vld [vmem:[%s267 + $0x30] sm:$0xff]
        %v305 = vld [vmem:[%s267 + $0x38] sm:$0xff]
        %v306 = vld [vmem:[%s267 + $0x40] sm:$0xff]
        %v307 = vld [vmem:[%s267 + $0x48] sm:$0xff]
        %v308 = vld [vmem:[%s267 + $0x50] sm:$0xff]
        %v309 = vld [vmem:[%s267 + $0x58] sm:$0xff]
        %v310 = vld [vmem:[%s267 + $0x60] sm:$0xff]
        %v311 = vld [vmem:[%s267 + $0x68] sm:$0xff]
        %v312 = vld [vmem:[%s267 + $0x70] sm:$0xff]
        %v313 = vld [vmem:[%s267 + $0x78] sm:$0xff]
        %v314 = vld [vmem:[%s267 + $0x80] sm:$0xff]
        %v315 = vld [vmem:[%s267 + $0x88] sm:$0xff]
        %v316 = vld [vmem:[%s267 + $0x90] sm:$0xff]
        %v317 = vld [vmem:[%s267 + $0x98] sm:$0xff]
        %v318 = vld [vmem:[%s267 + $0xa0] sm:$0xff]
        %v319 = vld [vmem:[%s267 + $0xa8] sm:$0xff]
        %v320 = vld [vmem:[%s267 + $0xb0] sm:$0xff]
        %v321 = vld [vmem:[%s267 + $0xb8] sm:$0xff]
        %v322 = vld [vmem:[%s267 + $0xc0] sm:$0xff]
        %v323 = vld [vmem:[%s267 + $0xc8] sm:$0xff]
        %v324 = vld [vmem:[%s267 + $0xd0] sm:$0xff]
        %v325 = vld [vmem:[%s267 + $0xd8] sm:$0xff]
        %v326 = vld [vmem:[%s267 + $0xe0] sm:$0xff]
        %v327 = vld [vmem:[%s267 + $0xe8] sm:$0xff]
        %v328 = vld [vmem:[%s267 + $0xf0] sm:$0xff]
        %v329 = vld [vmem:[%s267 + $0xf8] sm:$0xff]
        %v330 = vadd.f32 %v298, %v299
        %v331 = vadd.f32 %v330, %v300
        %v332 = vadd.f32 %v331, %v301
        %v333 = vadd.f32 %v332, %v302
        %v334 = vadd.f32 %v333, %v303
        %v335 = vadd.f32 %v334, %v304
        %v336 = vadd.f32 %v335, %v305
        %337 = vadd.xlane.f32.xlu0 %v336
        %v338 = vpop.xlane.xlu0 %337
        %v339 = vadd.f32 %v306, %v307
        %v340 = vadd.f32 %v339, %v308
        %v341 = vadd.f32 %v340, %v309
        %v342 = vadd.f32 %v341, %v310
        %v343 = vadd.f32 %v342, %v311
        %v344 = vadd.f32 %v343, %v312
        %v345 = vadd.f32 %v344, %v313
        %346 = vadd.xlane.f32.xlu0 %v345
        %v347 = vpop.xlane.xlu0 %346
        %v348 = vadd.f32 %v314, %v315
        %v349 = vadd.f32 %v348, %v316
        %v350 = vadd.f32 %v349, %v317
        %v351 = vadd.f32 %v350, %v318
        %v352 = vadd.f32 %v351, %v319
        %v353 = vadd.f32 %v352, %v320
        %v354 = vadd.f32 %v353, %v321
        %355 = vadd.xlane.f32.xlu0 %v354
        %v356 = vpop.xlane.xlu0 %355
        %v357 = vadd.f32 %v322, %v323
        %v358 = vadd.f32 %v357, %v324
        %v359 = vadd.f32 %v358, %v325
        %v360 = vadd.f32 %v359, %v326
        %v361 = vadd.f32 %v360, %v327
        %v362 = vadd.f32 %v361, %v328
        %v363 = vadd.f32 %v362, %v329
        %364 = vadd.xlane.f32.xlu0 %v363
        %v365 = vpop.xlane.xlu0 %364
        %v366 = vmul.f32 %v338, 0.0009765625
        %v367 = vmul.f32 %v347, 0.0009765625
        %v368 = vmul.f32 %v356, 0.0009765625
        %v369 = vmul.f32 %v365, 0.0009765625
        %v370 = vld [vmem:[%s1] sm:$0xff]
        %v371 = vld [vmem:[%s1 + $0x8] sm:$0xff]
        %v372 = vld [vmem:[%s1 + $0x10] sm:$0xff]
        %v373 = vld [vmem:[%s1 + $0x18] sm:$0xff]
        %v374 = vmul.f32 %v370, %v366
        %v375 = vmul.f32 %v371, %v367
        %v376 = vmul.f32 %v372, %v368
        %v377 = vmul.f32 %v373, %v369
        %vm378 = vcmask 15360
        %v379 = vsel %vm378, %v374, 0.0
        %v380 = vsel %vm378, %v375, 0.0
        %v381 = vadd.f32 %v379, %v380
        %v382 = vsel %vm378, %v376, 0.0
        %v383 = vadd.f32 %v381, %v382
        %v384 = vsel %vm378, %v377, 0.0
        %v385 = vadd.f32 %v383, %v384
        %v386 = vrot.slane %v385, 4
        %v387 = vadd.f32 %v385, %v386
        %v388 = vrot.slane %v387, 2
        %v389 = vadd.f32 %v387, %v388
        %v390 = vrot.slane %v389, 1
        %v391 = vadd.f32 %v389, %v390
        %v392 = vld [vmem:[%s2] sm:$0x1]
        %v393 = vadd.f32 %v391, %v392
        %v394 = vmax.f32 %v393, 0.0
        %v395 = vld [vmem:[%s3] sm:$0xff]
        %v396 = vld [vmem:[%s3 + $0x8] sm:$0xff]
        %v397 = vld [vmem:[%s3 + $0x10] sm:$0xff]
        %v398 = vld [vmem:[%s3 + $0x18] sm:$0xff]
        %v399 = vlaneseq
        %v400 = vshrl.u32 %v399, 7
        %v401 = vsub.s32 0, %v400
        %v402 = vrot.slane %v394, %v401
        %v403 = vmul.f32 %v395, %v402
        %v404 = vmul.f32 %v396, %v402
        %v405 = vmul.f32 %v397, %v402
        %v406 = vmul.f32 %v398, %v402
        %v407 = vsel %vm378, %v403, 0.0
        %408 = vadd.xlane.f32.xlu0 %v407
        %v409 = vpop.xlane.xlu0 %408
        %v410 = vsel %vm378, %v404, 0.0
        %411 = vadd.xlane.f32.xlu0 %v410
        %v412 = vpop.xlane.xlu0 %411
        %v413 = vsel %vm378, %v405, 0.0
        %414 = vadd.xlane.f32.xlu0 %v413
        %v415 = vpop.xlane.xlu0 %414
        %v416 = vsel %vm378, %v406, 0.0
        %417 = vadd.xlane.f32.xlu0 %v416
        %v418 = vpop.xlane.xlu0 %417
        %v419 = vld [vmem:[%s4] sm:$0xff]
        %v420 = vld [vmem:[%s4 + $0x8] sm:$0xff]
        %v421 = vld [vmem:[%s4 + $0x10] sm:$0xff]
        %v422 = vld [vmem:[%s4 + $0x18] sm:$0xff]
        %v423 = vadd.f32 %v409, %v419
        %v424 = vadd.f32 %v412, %v420
        %v425 = vadd.f32 %v415, %v421
        %v426 = vadd.f32 %v418, %v422
        %v427 = vxor.u32 %v423, 2147483648
        %v428 = vxor.u32 %v424, 2147483648
        %v429 = vxor.u32 %v425, 2147483648
        %v430 = vxor.u32 %v426, 2147483648
        %v431 = vmul.f32 %v427, 1.442695
        %v432 = vpow.pop %v431
        %v433 = vmul.f32 %v428, 1.442695
        %v434 = vpow.pop %v433
        %v435 = vmul.f32 %v429, 1.442695
        %v436 = vpow.pop %v435
        %v437 = vmul.f32 %v430, 1.442695
        %v438 = vpow.pop %v437
        %v439 = vadd.f32 %v432, 1.0
        %v440 = vadd.f32 %v434, 1.0
        %v441 = vadd.f32 %v436, 1.0
        %v442 = vadd.f32 %v438, 1.0
        %v443 = vrcp.pop %v439
        %v444 = vmul.f32 1.0, %v443
        %v445 = vrcp.pop %v440
        %v446 = vmul.f32 1.0, %v445
        %v447 = vrcp.pop %v441
        %v448 = vmul.f32 1.0, %v447
        %v449 = vrcp.pop %v442
        %v450 = vmul.f32 1.0, %v449
        %v451 = vld [vmem:[%s5] sm:$0xff]
        %v452 = vld [vmem:[%s5 + $0x8] sm:$0xff]
        %v453 = vld [vmem:[%s5 + $0x10] sm:$0xff]
        %v454 = vld [vmem:[%s5 + $0x18] sm:$0xff]
        %456 = vset.pattern.permute.xlu0 0
        %457 = vperm.xlu0 %456, %v451
        %v458 = vpop.permute.xlu0 %457
        %461 = vset.pattern.permute.xlu0 0
        %462 = vperm.xlu0 %461, %v452
        %v463 = vpop.permute.xlu0 %462
        %466 = vset.pattern.permute.xlu0 0
        %467 = vperm.xlu0 %466, %v453
        %v468 = vpop.permute.xlu0 %467
        %471 = vset.pattern.permute.xlu0 0
        %472 = vperm.xlu0 %471, %v454
        %v473 = vpop.permute.xlu0 %472
        %v475 = vmul.f32 %v458, %v298
        %v476 = vmul.f32 %v458, %v299
        %v477 = vmul.f32 %v458, %v300
        %v478 = vmul.f32 %v458, %v301
        %v479 = vmul.f32 %v458, %v302
        %v480 = vmul.f32 %v458, %v303
        %v481 = vmul.f32 %v458, %v304
        %v482 = vmul.f32 %v458, %v305
        %v483 = vmul.f32 %v463, %v306
        %v484 = vmul.f32 %v463, %v307
        %v485 = vmul.f32 %v463, %v308
        %v486 = vmul.f32 %v463, %v309
        %v487 = vmul.f32 %v463, %v310
        %v488 = vmul.f32 %v463, %v311
        %v489 = vmul.f32 %v463, %v312
        %v490 = vmul.f32 %v463, %v313
        %v491 = vmul.f32 %v468, %v314
        %v492 = vmul.f32 %v468, %v315
        %v493 = vmul.f32 %v468, %v316
        %v494 = vmul.f32 %v468, %v317
        %v495 = vmul.f32 %v468, %v318
        %v496 = vmul.f32 %v468, %v319
        %v497 = vmul.f32 %v468, %v320
        %v498 = vmul.f32 %v468, %v321
        %v499 = vmul.f32 %v473, %v322
        %v500 = vmul.f32 %v473, %v323
        %v501 = vmul.f32 %v473, %v324
        %v502 = vmul.f32 %v473, %v325
        %v503 = vmul.f32 %v473, %v326
        %v504 = vmul.f32 %v473, %v327
        %v505 = vmul.f32 %v473, %v328
        %v506 = vmul.f32 %v473, %v329
        %v507 = vadd.f32 %v475, %v483
        %v508 = vadd.f32 %v507, %v491
        %v509 = vadd.f32 %v508, %v499
        %v510 = vrot.slane %v509, 4
        %v511 = vadd.f32 %v509, %v510
        %v512 = vrot.slane %v511, 2
        %v513 = vadd.f32 %v511, %v512
        %v514 = vrot.slane %v513, 1
        %v515 = vadd.f32 %v513, %v514
        %v516 = vadd.f32 %v476, %v484
        %v517 = vadd.f32 %v516, %v492
        %v518 = vadd.f32 %v517, %v500
        %v519 = vrot.slane %v518, 4
        %v520 = vadd.f32 %v518, %v519
        %v521 = vrot.slane %v520, 2
        %v522 = vadd.f32 %v520, %v521
        %v523 = vrot.slane %v522, 1
        %v524 = vadd.f32 %v522, %v523
        %v525 = vadd.f32 %v477, %v485
        %v526 = vadd.f32 %v525, %v493
        %v527 = vadd.f32 %v526, %v501
        %v528 = vrot.slane %v527, 4
        %v529 = vadd.f32 %v527, %v528
        %v530 = vrot.slane %v529, 2
        %v531 = vadd.f32 %v529, %v530
        %v532 = vrot.slane %v531, 1
        %v533 = vadd.f32 %v531, %v532
        %v534 = vadd.f32 %v478, %v486
        %v535 = vadd.f32 %v534, %v494
        %v536 = vadd.f32 %v535, %v502
        %v537 = vrot.slane %v536, 4
        %v538 = vadd.f32 %v536, %v537
        %v539 = vrot.slane %v538, 2
        %v540 = vadd.f32 %v538, %v539
        %v541 = vrot.slane %v540, 1
        %v542 = vadd.f32 %v540, %v541
        %v543 = vadd.f32 %v479, %v487
        %v544 = vadd.f32 %v543, %v495
        %v545 = vadd.f32 %v544, %v503
        %v546 = vrot.slane %v545, 4
        %v547 = vadd.f32 %v545, %v546
        %v548 = vrot.slane %v547, 2
        %v549 = vadd.f32 %v547, %v548
        %v550 = vrot.slane %v549, 1
        %v551 = vadd.f32 %v549, %v550
        %v552 = vadd.f32 %v480, %v488
        %v553 = vadd.f32 %v552, %v496
        %v554 = vadd.f32 %v553, %v504
        %v555 = vrot.slane %v554, 4
        %v556 = vadd.f32 %v554, %v555
        %v557 = vrot.slane %v556, 2
        %v558 = vadd.f32 %v556, %v557
        %v559 = vrot.slane %v558, 1
        %v560 = vadd.f32 %v558, %v559
        %v561 = vadd.f32 %v481, %v489
        %v562 = vadd.f32 %v561, %v497
        %v563 = vadd.f32 %v562, %v505
        %v564 = vrot.slane %v563, 4
        %v565 = vadd.f32 %v563, %v564
        %v566 = vrot.slane %v565, 2
        %v567 = vadd.f32 %v565, %v566
        %v568 = vrot.slane %v567, 1
        %v569 = vadd.f32 %v567, %v568
        %v570 = vadd.f32 %v482, %v490
        %v571 = vadd.f32 %v570, %v498
        %v572 = vadd.f32 %v571, %v506
        %v573 = vrot.slane %v572, 4
        %v574 = vadd.f32 %v572, %v573
        %v575 = vrot.slane %v574, 2
        %v576 = vadd.f32 %v574, %v575
        %v577 = vrot.slane %v576, 1
        %v578 = vadd.f32 %v576, %v577
        %s579 = sld [smem:[#allocation2]]
        %v580 = vstv %s579
        %v581 = vadd.f32 %v515, %v580
        %v582 = vadd.f32 %v524, %v580
        %v583 = vadd.f32 %v533, %v580
        %v584 = vadd.f32 %v542, %v580
        %v585 = vadd.f32 %v551, %v580
        %v586 = vadd.f32 %v560, %v580
        %v587 = vadd.f32 %v569, %v580
        %v588 = vadd.f32 %v578, %v580
        %v589 = vxor.u32 %v581, 2147483648
        %v590 = vxor.u32 %v582, 2147483648
        %v591 = vxor.u32 %v583, 2147483648
        %v592 = vxor.u32 %v584, 2147483648
        %v593 = vxor.u32 %v585, 2147483648
        %v594 = vxor.u32 %v586, 2147483648
        %v595 = vxor.u32 %v587, 2147483648
        %v596 = vxor.u32 %v588, 2147483648
        %v597 = vmul.f32 %v589, 1.442695
        %v598 = vpow.pop %v597
        %v599 = vmul.f32 %v590, 1.442695
        %v600 = vpow.pop %v599
        %v601 = vmul.f32 %v591, 1.442695
        %v602 = vpow.pop %v601
        %v603 = vmul.f32 %v592, 1.442695
        %v604 = vpow.pop %v603
        %v605 = vmul.f32 %v593, 1.442695
        %v606 = vpow.pop %v605
        %v607 = vmul.f32 %v594, 1.442695
        %v608 = vpow.pop %v607
        %v609 = vmul.f32 %v595, 1.442695
        %v610 = vpow.pop %v609
        %v611 = vmul.f32 %v596, 1.442695
        %v612 = vpow.pop %v611
        %v613 = vadd.f32 %v598, 1.0
        %v614 = vadd.f32 %v600, 1.0
        %v615 = vadd.f32 %v602, 1.0
        %v616 = vadd.f32 %v604, 1.0
        %v617 = vadd.f32 %v606, 1.0
        %v618 = vadd.f32 %v608, 1.0
        %v619 = vadd.f32 %v610, 1.0
        %v620 = vadd.f32 %v612, 1.0
        %v621 = vrcp.pop %v613
        %v622 = vmul.f32 1.0, %v621
        %v623 = vrcp.pop %v614
        %v624 = vmul.f32 1.0, %v623
        %v625 = vrcp.pop %v615
        %v626 = vmul.f32 1.0, %v625
        %v627 = vrcp.pop %v616
        %v628 = vmul.f32 1.0, %v627
        %v629 = vrcp.pop %v617
        %v630 = vmul.f32 1.0, %v629
        %v631 = vrcp.pop %v618
        %v632 = vmul.f32 1.0, %v631
        %v633 = vrcp.pop %v619
        %v634 = vmul.f32 1.0, %v633
        %v635 = vrcp.pop %v620
        %v636 = vmul.f32 1.0, %v635
        %638 = vset.pattern.permute.xlu0 0
        %639 = vperm.xlu0 %638, %v444
        %v640 = vpop.permute.xlu0 %639
        %643 = vset.pattern.permute.xlu0 0
        %644 = vperm.xlu0 %643, %v446
        %v645 = vpop.permute.xlu0 %644
        %648 = vset.pattern.permute.xlu0 0
        %649 = vperm.xlu0 %648, %v448
        %v650 = vpop.permute.xlu0 %649
        %653 = vset.pattern.permute.xlu0 0
        %654 = vperm.xlu0 %653, %v450
        %v655 = vpop.permute.xlu0 %654
        %v657 = vadd.f32 %v640, %v622
        %v658 = vadd.f32 %v640, %v624
        %v659 = vadd.f32 %v640, %v626
        %v660 = vadd.f32 %v640, %v628
        %v661 = vadd.f32 %v640, %v630
        %v662 = vadd.f32 %v640, %v632
        %v663 = vadd.f32 %v640, %v634
        %v664 = vadd.f32 %v640, %v636
        %v665 = vadd.f32 %v645, %v622
        %v666 = vadd.f32 %v645, %v624
        %v667 = vadd.f32 %v645, %v626
        %v668 = vadd.f32 %v645, %v628
        %v669 = vadd.f32 %v645, %v630
        %v670 = vadd.f32 %v645, %v632
        %v671 = vadd.f32 %v645, %v634
        %v672 = vadd.f32 %v645, %v636
        %v673 = vadd.f32 %v650, %v622
        %v674 = vadd.f32 %v650, %v624
        %v675 = vadd.f32 %v650, %v626
        %v676 = vadd.f32 %v650, %v628
        %v677 = vadd.f32 %v650, %v630
        %v678 = vadd.f32 %v650, %v632
        %v679 = vadd.f32 %v650, %v634
        %v680 = vadd.f32 %v650, %v636
        %v681 = vadd.f32 %v655, %v622
        %v682 = vadd.f32 %v655, %v624
        %v683 = vadd.f32 %v655, %v626
        %v684 = vadd.f32 %v655, %v628
        %v685 = vadd.f32 %v655, %v630
        %v686 = vadd.f32 %v655, %v632
        %v687 = vadd.f32 %v655, %v634
        %v688 = vadd.f32 %v655, %v636
        %v689 = vmul.f32 %v298, %v657
        %v690 = vmul.f32 %v299, %v658
        %v691 = vmul.f32 %v300, %v659
        %v692 = vmul.f32 %v301, %v660
        %v693 = vmul.f32 %v302, %v661
        %v694 = vmul.f32 %v303, %v662
        %v695 = vmul.f32 %v304, %v663
        %v696 = vmul.f32 %v305, %v664
        %v697 = vmul.f32 %v306, %v665
        %v698 = vmul.f32 %v307, %v666
        %v699 = vmul.f32 %v308, %v667
        %v700 = vmul.f32 %v309, %v668
        %v701 = vmul.f32 %v310, %v669
        %v702 = vmul.f32 %v311, %v670
        %v703 = vmul.f32 %v312, %v671
        %v704 = vmul.f32 %v313, %v672
        %v705 = vmul.f32 %v314, %v673
        %v706 = vmul.f32 %v315, %v674
        %v707 = vmul.f32 %v316, %v675
        %v708 = vmul.f32 %v317, %v676
        %v709 = vmul.f32 %v318, %v677
        %v710 = vmul.f32 %v319, %v678
        %v711 = vmul.f32 %v320, %v679
        %v712 = vmul.f32 %v321, %v680
        %v713 = vmul.f32 %v322, %v681
        %v714 = vmul.f32 %v323, %v682
        %v715 = vmul.f32 %v324, %v683
        %v716 = vmul.f32 %v325, %v684
        %v717 = vmul.f32 %v326, %v685
        %v718 = vmul.f32 %v327, %v686
        %v719 = vmul.f32 %v328, %v687
        %v720 = vmul.f32 %v329, %v688
        %721 = vst [vmem:[%s297] sm:$0xff] %v689
        %722 = vst [vmem:[%s297 + $0x8] sm:$0xff] %v690
        %723 = vst [vmem:[%s297 + $0x10] sm:$0xff] %v691
        %724 = vst [vmem:[%s297 + $0x18] sm:$0xff] %v692
        %725 = vst [vmem:[%s297 + $0x20] sm:$0xff] %v693
        %726 = vst [vmem:[%s297 + $0x28] sm:$0xff] %v694
        %727 = vst [vmem:[%s297 + $0x30] sm:$0xff] %v695
        %728 = vst [vmem:[%s297 + $0x38] sm:$0xff] %v696
        %729 = vst [vmem:[%s297 + $0x40] sm:$0xff] %v697
        %730 = vst [vmem:[%s297 + $0x48] sm:$0xff] %v698
        %731 = vst [vmem:[%s297 + $0x50] sm:$0xff] %v699
        %732 = vst [vmem:[%s297 + $0x58] sm:$0xff] %v700
        %733 = vst [vmem:[%s297 + $0x60] sm:$0xff] %v701
        %734 = vst [vmem:[%s297 + $0x68] sm:$0xff] %v702
        %735 = vst [vmem:[%s297 + $0x70] sm:$0xff] %v703
        %736 = vst [vmem:[%s297 + $0x78] sm:$0xff] %v704
        %737 = vst [vmem:[%s297 + $0x80] sm:$0xff] %v705
        %738 = vst [vmem:[%s297 + $0x88] sm:$0xff] %v706
        %739 = vst [vmem:[%s297 + $0x90] sm:$0xff] %v707
        %740 = vst [vmem:[%s297 + $0x98] sm:$0xff] %v708
        %741 = vst [vmem:[%s297 + $0xa0] sm:$0xff] %v709
        %742 = vst [vmem:[%s297 + $0xa8] sm:$0xff] %v710
        %743 = vst [vmem:[%s297 + $0xb0] sm:$0xff] %v711
        %744 = vst [vmem:[%s297 + $0xb8] sm:$0xff] %v712
        %745 = vst [vmem:[%s297 + $0xc0] sm:$0xff] %v713
        %746 = vst [vmem:[%s297 + $0xc8] sm:$0xff] %v714
        %747 = vst [vmem:[%s297 + $0xd0] sm:$0xff] %v715
        %748 = vst [vmem:[%s297 + $0xd8] sm:$0xff] %v716
        %749 = vst [vmem:[%s297 + $0xe0] sm:$0xff] %v717
        %750 = vst [vmem:[%s297 + $0xe8] sm:$0xff] %v718
        %751 = vst [vmem:[%s297 + $0xf0] sm:$0xff] %v719
        %752 = vst [vmem:[%s297 + $0xf8] sm:$0xff] %v720
        %s753 = sand.u32 %s185, 1
        %s754 = scalar_lea.sflag [#allocation5], %s753
        %s755 = sand.u32 %s185, 1
        %s756 = smul.addr %s755, 256
        %s757 = scalar_lea.vmem [#allocation6], %s756
        // Predicated region
        $region53: #{tpu_custom_call.1} parent=47 // pred_check
          %p758 = pneg %p195
        $region54: #{tpu_custom_call.1} parent=47 // pred_check_branch
          %760 = sbr.rel (%p758) target = $region56
        $region55: #{tpu_custom_call.1} parent=47 // pred_region
          %s762 = ssub.s32 4096, 4096
          %763 = vsyncadd %s754, %s762
          %s764 = smul.addr %s25, 32
          %s765 = smul.addr %s764, 128
          %s766 = scalar_lea.hbm %s7, %s765
          %s767 = sshll.u32 %s757, 4
          %s768 = int_to_ptr.vmem [resolvable:$true] %s767
          %773 = dma.vmem_to_hbm [thread:$0]  %s768, 4096, %s766, %s754, 1024, 1024, 64
        $region56: #{tpu_custom_call.1} parent=47 // pred_fallthru
          _
      $region48: #{tpu_custom_call.1} parent=5 // pred_fallthru
        _
      %p774 = scmp.le.s32.totalorder 2, %s20
      // Predicated region
      $region57: #{tpu_custom_call.1} parent=5 // pred_check
        %p775 = pneg %p774
      $region58: #{tpu_custom_call.1} parent=5 // pred_check_branch
        %777 = sbr.rel (%p775) target = $region60
      $region59: #{tpu_custom_call.1} parent=5 // pred_region
        %s778 = ssub.s32 %s20, 2
        // Predicated region
        $region61: #{tpu_custom_call.1} parent=59 // pred_check
          %p779 = pneg %p201
        $region62: #{tpu_custom_call.1} parent=59 // pred_check_branch
          %781 = sbr.rel (%p779) target = $region64
        $region63: #{tpu_custom_call.1} parent=59 // pred_region
          %s782 = sand.u32 %s186, 1
          %s783 = scalar_lea.sflag [#allocation5], %s782
          %s784 = sand.u32 %s186, 1
          %s785 = smul.addr %s784, 256
          %s786 = scalar_lea.vmem [#allocation6], %s785
          %787 = dma.done %s783, 4096
        $region64: #{tpu_custom_call.1} parent=59 // pred_fallthru
          _
      $region60: #{tpu_custom_call.1} parent=5 // pred_fallthru
        _
    $region6: #{tpu_custom_call.1} parent=1 // loop_footer
      %s24 = sadd.s32 1, %s20
    $region7: #{tpu_custom_call.1} parent=1 // loop_footer_branch
      %19 = sbr.rel target = $region3
    $region8: #{tpu_custom_call.1} parent=1 // loop_exit
      _
    %788 = vsyncpa [#allocation4], 1
    %s789 = scalar_lea.sflag [#allocation4], 1
    %790 = vsyncpa %s789, 1
    %791 = vsyncpa [#allocation5], 1
    %s792 = scalar_lea.sflag [#allocation5], 1
    %793 = vsyncpa %s792, 1

</llo_original>
